<compile_context>
chip_gen: v7x
topology: tpu7x:2x2x1
jax: 0.10.0
libtpu: 0.0.40
codegen_flags: <defaults>
</compile_context>

<pallas_src>
import functools

import jax
import jax.numpy as jnp
from jax.experimental import pallas as pl
from jax.experimental.pallas import tpu as pltpu


def _fusion_a_kernel(x_ref, w_ref, gb_ref, o_ref, *, use_bf16_matmul=False):
    """Per-instance body.

    x_ref : (2C, N)  input objs for this batch element
    w_ref : (C, 2C)  1x1-conv weight (kernel dim squeezed)
    gb_ref: (C, 2)   column 0 = GroupNorm gamma, column 1 = beta
    o_ref : (3, C, N) fused output slab:
            o[0], o[1] = the two (C, N) halves of x (the `objs.view(2,C,N)` feats)
            o[2]       = GroupNorm(C, C)(Conv1d(2C, C, 1)(x))
    """
    C = w_ref.shape[0]
    N = x_ref.shape[1]

    x = x_ref[...]                                             # (2C, N) f32
    w = w_ref[...]                                             # (C, 2C) f32
    gb = gb_ref[...]                                           # (C, 2)  f32
    gamma = gb[:, 0:1]                                         # (C, 1)
    beta = gb[:, 1:2]                                          # (C, 1)

    # ---- fused branch: 1x1 conv (MXU matmul) + per-channel GroupNorm -------
    # Conv bias omitted: constant over N, cancelled exactly by mean subtraction
    # (valid because num_groups == C, i.e. per-channel normalization).
    if use_bf16_matmul:
        y = jnp.dot(w.astype(jnp.bfloat16), x.astype(jnp.bfloat16),
                    preferred_element_type=jnp.float32)        # (C, N)
    else:
        y = jnp.dot(w, x, preferred_element_type=jnp.float32)  # (C, N)

    # Single-pass mean / variance: two lane (XLU) reductions back-to-back.
    inv_n = jnp.float32(1.0 / N)
    s = jnp.sum(y, axis=-1, keepdims=True)                     # (C, 1)
    ss = jnp.sum(y * y, axis=-1, keepdims=True)                # (C, 1)
    mean = s * inv_n
    # Clamp: E[y^2]-E[y]^2 can round to a small negative in f32 -> NaN in rsqrt.
    var = jnp.maximum(ss * inv_n - mean * mean, 0.0)
    scale = gamma * jax.lax.rsqrt(var + 1e-5)                  # gamma folded in
    fused = (y - mean) * scale + beta                          # (C, N)

    # ---- fused concat: write all three slabs of the (3, C, N) output -------
    # N=128 on lanes -> unmasked lane-dense vector stores.
    o_ref[0] = x[:C, :].astype(o_ref.dtype)
    o_ref[1] = x[C:, :].astype(o_ref.dtype)
    o_ref[2] = fused.astype(o_ref.dtype)
    # TODO(synk): if N grows well beyond 128 (v5e, single vst slot / 16 MiB
    # scoped VMEM), split GroupNorm into a gridded two-pass form (stats pass,
    # then normalize+store pass) with N tiled instead of whole-array blocks.


def fusion_module_a_forward_batched(objs, conv_w, conv_b, gn_gamma, gn_beta,
                                     *, use_bf16_matmul=False):
    """Batched forward.

    objs   : (B, 2C, N) float32 -- B independent module invocations.
    conv_w : (C, 2C)  Conv1d(2C, C, 1) weight with the k=1 dim squeezed.
    conv_b : (C,)     Conv1d bias (mathematically cancelled, see kernel docs).
    gn_*   : (C,)     GroupNorm affine params.
    Returns (B, 3, C, N).
    """
    B, D, N = objs.shape
    C = D // 2
    assert conv_w.shape == (C, D)
    # Bias-drop assumption: the module uses GroupNorm(out_channels, out_channels),
    # i.e. num_groups == C (per-channel), so the constant bias cancels exactly.
    del conv_b

    # Merge gamma/beta into a single (C, 2) VMEM operand (one fewer DMA).
    gb = jnp.stack(
        [gn_gamma.astype(jnp.float32), gn_beta.astype(jnp.float32)], axis=-1)

    kernel = functools.partial(_fusion_a_kernel,
                               use_bf16_matmul=use_bf16_matmul)

    return pl.pallas_call(
        kernel,
        out_shape=jax.ShapeDtypeStruct((B, 3, C, N), objs.dtype),
        grid=(B,),
        in_specs=[
            # Per-instance input block; batch dim squeezed away in the kernel.
            pl.BlockSpec((pl.Squeezed(), D, N), lambda b: (b, 0, 0)),
            # Weight / affine params resident across the whole grid.
            pl.BlockSpec((C, D), lambda b: (0, 0)),
            pl.BlockSpec((C, 2), lambda b: (0, 0)),
        ],
        out_specs=pl.BlockSpec((pl.Squeezed(), 3, C, N),
                               lambda b: (b, 0, 0, 0)),
        compiler_params=pltpu.CompilerParams(
            dimension_semantics=("parallel",)),  # both v7x TCs in the batched case
    )(objs, conv_w, gb)


def fusion_module_a_forward(objs, conv_w, conv_b, gn_gamma, gn_beta):
    """Single-sample forward matching the PyTorch module.

    objs: (1, 2C, N) float32.  Returns (3, C, N).
    """
    _, D, N = objs.shape
    out = fusion_module_a_forward_batched(
        objs.reshape(1, D, N), conv_w, conv_b, gn_gamma, gn_beta)
    return out[0]


def _reference_single(x, conv_w, conv_b, gn_gamma, gn_beta):
    """Pure-JAX reference of the PyTorch module for one sample (includes bias).

    x: (2C, N) -> (3, C, N)
    """
    C = conv_w.shape[0]
    y = conv_w @ x + conv_b[:, None]                           # (C, N)
    mean = jnp.mean(y, axis=-1, keepdims=True)
    var = jnp.mean((y - mean) ** 2, axis=-1, keepdims=True)
    y = (y - mean) / jnp.sqrt(var + 1e-5)
    y = y * gn_gamma[:, None] + gn_beta[:, None]
    feats = x.reshape(2, C, -1)
    return jnp.concatenate([feats, y[None]], axis=0)


if __name__ == "__main__":
    # Small shapes consistent with the module:
    #   out_channels C = 32, Conv1d input channels 2C = 64, N = 128 objects,
    #   plus a batch of B = 4 module invocations fused into one pallas_call.
    C = 32
    N = 128
    D = 2 * C
    B = 4

    key = jax.random.PRNGKey(0)
    k_objs, k_w, k_b, k_g, k_be = jax.random.split(key, 5)

    objs_b = jax.random.normal(k_objs, (B, D, N), dtype=jnp.float32)

    # Deterministic parameter init (shapes follow the module's __init__):
    #   Conv1d(2C, C, kernel_size=1) weight -> (C, 2C) after squeezing k=1.
    conv_w = jax.random.normal(k_w, (C, D), dtype=jnp.float32) * (1.0 / jnp.sqrt(D))
    conv_b = jax.random.normal(k_b, (C,), dtype=jnp.float32) * 0.1
    # Non-trivial GroupNorm affine params to exercise the affine path.
    gn_gamma = 1.0 + 0.1 * jax.random.normal(k_g, (C,), dtype=jnp.float32)
    gn_beta = 0.1 * jax.random.normal(k_be, (C,), dtype=jnp.float32)

    # --- batched path ---------------------------------------------------
    out_b = fusion_module_a_forward_batched(objs_b, conv_w, conv_b,
                                            gn_gamma, gn_beta)
    out_b = jax.block_until_ready(out_b)
    assert out_b.shape == (B, 3, C, N), out_b.shape

    ref_b = jax.vmap(
        lambda x: _reference_single(x, conv_w, conv_b, gn_gamma, gn_beta))(objs_b)
    assert jnp.allclose(out_b, ref_b, rtol=1e-3, atol=1e-3), float(
        jnp.max(jnp.abs(out_b - ref_b)))

    # --- single-sample path (the module's actual (1, 2C, N) signature) ---
    objs_1 = objs_b[:1]                                        # (1, 2C, N)
    out_1 = fusion_module_a_forward(objs_1, conv_w, conv_b, gn_gamma, gn_beta)
    out_1 = jax.block_until_ready(out_1)
    assert out_1.shape == (3, C, N), out_1.shape
    ref_1 = _reference_single(objs_1[0], conv_w, conv_b, gn_gamma, gn_beta)
    assert jnp.allclose(out_1, ref_1, rtol=1e-3, atol=1e-3), float(
        jnp.max(jnp.abs(out_1 - ref_1)))

    print("KERNEL_OK")
</pallas_src>

<mosaic_0001>
module attributes {stable_mosaic.version = 11 : i64} {
  func.func @_fusion_a_kernel(%arg0: i32, %arg1: memref<1x64x128xf32, #tpu.memory_space<vmem>>, %arg2: memref<32x64xf32, #tpu.memory_space<vmem>>, %arg3: memref<32x2xf32, #tpu.memory_space<vmem>>, %arg4: memref<1x3x32x128xf32, #tpu.memory_space<vmem>>) attributes {dimension_semantics = [#tpu.dimension_semantics<parallel>], iteration_bounds = array<i64: 4>, scalar_prefetch = 0 : i64, scratch_operands = 0 : i64, tpu.core_type = #tpu.core_type<tc>, window_params = [{transform_indices = @transform_0, window_bounds = array<i64: 1, 64, 128>}, {pipeline_mode = #tpu.pipeline_mode<synchronous>, transform_indices = @transform_1, window_bounds = array<i64: 32, 64>}, {pipeline_mode = #tpu.pipeline_mode<synchronous>, transform_indices = @transform_2, window_bounds = array<i64: 32, 2>}, {transform_indices = @transform_3, window_bounds = array<i64: 1, 3, 32, 128>}]} {
    %c0 = arith.constant 0 : index
    %c0_0 = arith.constant 0 : index
    %c0_1 = arith.constant 0 : index
    %0 = vector.load %arg1[%c0, %c0_0, %c0_1] : memref<1x64x128xf32, #tpu.memory_space<vmem>>, vector<1x64x128xf32>
    %1 = vector.shape_cast %0 : vector<1x64x128xf32> to vector<64x128xf32>
    %c0_2 = arith.constant 0 : index
    %c0_3 = arith.constant 0 : index
    %2 = vector.load %arg2[%c0_2, %c0_3] : memref<32x64xf32, #tpu.memory_space<vmem>>, vector<32x64xf32>
    %c0_4 = arith.constant 0 : index
    %c0_5 = arith.constant 0 : index
    %3 = vector.load %arg3[%c0_4, %c0_5] : memref<32x2xf32, #tpu.memory_space<vmem>>, vector<32x2xf32>
    %4 = vector.extract_strided_slice %3 {offsets = [0, 0], sizes = [32, 1], strides = [1, 1]} : vector<32x2xf32> to vector<32x1xf32>
    %5 = vector.extract_strided_slice %3 {offsets = [0, 1], sizes = [32, 1], strides = [1, 1]} : vector<32x2xf32> to vector<32x1xf32>
    %cst = arith.constant dense<0.000000e+00> : vector<32x128xf32>
    %6 = tpu.matmul %2, %1, %cst {dimension_numbers = #tpu.dot_dimension_numbers<[1], [0], [0], [1], [0, 0, 1, 1], [], []>} : vector<32x64xf32>, vector<64x128xf32>, vector<32x128xf32> -> vector<32x128xf32>
    %cst_6 = arith.constant dense<0.000000e+00> : vector<32xf32>
    %7 = vector.multi_reduction <add>, %6, %cst_6 [1] : vector<32x128xf32> to vector<32xf32>
    %8 = vector.shape_cast %7 : vector<32xf32> to vector<32x1xf32>
    %9 = arith.mulf %6, %6 : vector<32x128xf32>
    %cst_7 = arith.constant dense<0.000000e+00> : vector<32xf32>
    %10 = vector.multi_reduction <add>, %9, %cst_7 [1] : vector<32x128xf32> to vector<32xf32>
    %11 = vector.shape_cast %10 : vector<32xf32> to vector<32x1xf32>
    %cst_8 = arith.constant 7.812500e-03 : f32
    %12 = vector.broadcast %cst_8 : f32 to vector<32x1xf32>
    %13 = arith.mulf %8, %12 : vector<32x1xf32>
    %cst_9 = arith.constant 7.812500e-03 : f32
    %14 = vector.broadcast %cst_9 : f32 to vector<32x1xf32>
    %15 = arith.mulf %11, %14 : vector<32x1xf32>
    %16 = arith.mulf %13, %13 : vector<32x1xf32>
    %17 = arith.subf %15, %16 : vector<32x1xf32>
    %cst_10 = arith.constant 0.000000e+00 : f32
    %18 = vector.broadcast %cst_10 : f32 to vector<32x1xf32>
    %19 = arith.maximumf %17, %18 : vector<32x1xf32>
    %cst_11 = arith.constant 9.99999974E-6 : f32
    %20 = vector.broadcast %cst_11 : f32 to vector<32x1xf32>
    %21 = arith.addf %19, %20 : vector<32x1xf32>
    %22 = math.rsqrt %21 : vector<32x1xf32>
    %23 = arith.mulf %4, %22 : vector<32x1xf32>
    %24 = vector.broadcast %13 : vector<32x1xf32> to vector<32x128xf32>
    %25 = arith.subf %6, %24 : vector<32x128xf32>
    %26 = vector.broadcast %23 : vector<32x1xf32> to vector<32x128xf32>
    %27 = arith.mulf %25, %26 : vector<32x128xf32>
    %28 = vector.broadcast %5 : vector<32x1xf32> to vector<32x128xf32>
    %29 = arith.addf %27, %28 : vector<32x128xf32>
    %30 = vector.extract_strided_slice %1 {offsets = [0, 0], sizes = [32, 128], strides = [1, 1]} : vector<64x128xf32> to vector<32x128xf32>
    %c0_12 = arith.constant 0 : index
    %c0_13 = arith.constant 0 : index
    %c0_14 = arith.constant 0 : index
    %c0_15 = arith.constant 0 : index
    %31 = vector.load %arg4[%c0_12, %c0_13, %c0_14, %c0_15] : memref<1x3x32x128xf32, #tpu.memory_space<vmem>>, vector<1x1x32x128xf32>
    %32 = vector.shape_cast %31 : vector<1x1x32x128xf32> to vector<32x128xf32>
    %33 = vector.shape_cast %30 : vector<32x128xf32> to vector<1x1x32x128xf32>
    tpu.vector_store %arg4[%c0_12, %c0_13, %c0_14, %c0_15], %33 {strides = array<i32>} : memref<1x3x32x128xf32, #tpu.memory_space<vmem>>, vector<1x1x32x128xf32>,
    %34 = vector.extract_strided_slice %1 {offsets = [32, 0], sizes = [32, 128], strides = [1, 1]} : vector<64x128xf32> to vector<32x128xf32>
    %c0_16 = arith.constant 0 : index
    %c1 = arith.constant 1 : index
    %c0_17 = arith.constant 0 : index
    %c0_18 = arith.constant 0 : index
    %35 = vector.load %arg4[%c0_16, %c1, %c0_17, %c0_18] : memref<1x3x32x128xf32, #tpu.memory_space<vmem>>, vector<1x1x32x128xf32>
    %36 = vector.shape_cast %35 : vector<1x1x32x128xf32> to vector<32x128xf32>
    %37 = vector.shape_cast %34 : vector<32x128xf32> to vector<1x1x32x128xf32>
    tpu.vector_store %arg4[%c0_16, %c1, %c0_17, %c0_18], %37 {strides = array<i32>} : memref<1x3x32x128xf32, #tpu.memory_space<vmem>>, vector<1x1x32x128xf32>,
    %c0_19 = arith.constant 0 : index
    %c2 = arith.constant 2 : index
    %c0_20 = arith.constant 0 : index
    %c0_21 = arith.constant 0 : index
    %38 = vector.load %arg4[%c0_19, %c2, %c0_20, %c0_21] : memref<1x3x32x128xf32, #tpu.memory_space<vmem>>, vector<1x1x32x128xf32>
    %39 = vector.shape_cast %38 : vector<1x1x32x128xf32> to vector<32x128xf32>
    %40 = vector.shape_cast %29 : vector<32x128xf32> to vector<1x1x32x128xf32>
    tpu.vector_store %arg4[%c0_19, %c2, %c0_20, %c0_21], %40 {strides = array<i32>} : memref<1x3x32x128xf32, #tpu.memory_space<vmem>>, vector<1x1x32x128xf32>,
    return
  }
  func.func @transform_0(%arg0: i32) -> (i32, i32, i32) {
    %c0_i32 = arith.constant 0 : i32
    %c0_i32_0 = arith.constant 0 : i32
    %c0_i32_1 = arith.constant 0 : i32
    return %arg0, %c0_i32, %c0_i32_0 : i32, i32, i32
  }
  func.func @transform_1(%arg0: i32) -> (i32, i32) {
    %c0_i32 = arith.constant 0 : i32
    %c0_i32_0 = arith.constant 0 : i32
    %c0_i32_1 = arith.constant 0 : i32
    return %c0_i32, %c0_i32_0 : i32, i32
  }
  func.func @transform_2(%arg0: i32) -> (i32, i32) {
    %c0_i32 = arith.constant 0 : i32
    %c0_i32_0 = arith.constant 0 : i32
    %c0_i32_1 = arith.constant 0 : i32
    return %c0_i32, %c0_i32_0 : i32, i32
  }
  func.func @transform_3(%arg0: i32) -> (i32, i32, i32, i32) {
    %c0_i32 = arith.constant 0 : i32
    %c0_i32_0 = arith.constant 0 : i32
    %c0_i32_1 = arith.constant 0 : i32
    %c0_i32_2 = arith.constant 0 : i32
    return %arg0, %c0_i32, %c0_i32_0, %c0_i32_1 : i32, i32, i32, i32
  }
}

</mosaic_0001>

<llo_original>
// kernel: tpu_custom_call.1
$region0: #{tpu_custom_call.1}
  #allocation0 [shape = 'u32[]', space=smem, size = 0x4, offset = 0x4, fixed_abs, tag = 'smem constant byte address 0x4 - core index']
  #allocation1 [shape = 'u32[144,128]{1,0:T(1,128)}', space=vmem, size = 0x12000, scoped, tag = 'internal scratch']
  %s0 = inlined_call_operand.hbm [shape: f32[4,64,128], index: 0, kind: input, shape index: {}]
  %s1 = inlined_call_operand.vmem [shape: f32[32,64], index: 1, kind: input, shape index: {}]
  %s2 = inlined_call_operand.vmem [shape: f32[32,2], index: 2, kind: input, shape index: {}]
  %s3 = inlined_call_operand.hbm [shape: f32[4,3,32,128], index: 3, kind: output, shape index: {}]
  %s4 = sld [smem:[#allocation0]]
  $region49: #{tpu_custom_call.1} parent=0
    _
  %s6 = ssub.s32 1, %s4
  %s7 = scalar_select 0, %s6, %s4
  $region1: #{tpu_custom_call.1} parent=0
    #allocation2 [shape = 'u8[65536]{0}', space=vmem, size = 0x10000, scoped, tag = 'input window, operand 0']
    #allocation3 [shape = 's32[2]{0}', space=sflag, size = 0x8, scoped, tag = 'scoped memory for tpu_custom_call.1']
    #allocation4 [shape = 's32[2]{0}', space=sflag, size = 0x8, scoped, tag = 'scoped memory for tpu_custom_call.1']
    #allocation5 [shape = 'u8[98304]{0}', space=vmem, size = 0x18000, scoped, tag = 'output window, operand 0']
    %8 = vsyncpa [#allocation3], 0
    %s9 = scalar_lea.sflag [#allocation3], 1
    %10 = vsyncpa %s9, 0
    %11 = vsyncpa [#allocation4], 0
    %s12 = scalar_lea.sflag [#allocation4], 1
    %13 = vsyncpa %s12, 0
    loop: start=0, step=1, limit=6
    $region2: #{tpu_custom_call.1} parent=1 // loop_pre_header
      _
    $region3: #{tpu_custom_call.1} parent=1 // loop_header
      %s15 = sphi 0, %s19
      %p16 = scmp.ge.s32.totalorder %s15, 6
      %s25 = sphi 0, %s27
      %s28 = sphi 0, %s25
      %s29 = sphi 0, %s28
      %s45 = sphi 0, %s29
      %s49 = sphi 0, %s49
      %s51 = sphi 0, %s49
      %s52 = sphi 0, %s51
      %s66 = sphi 0, %s52
      %s70 = sphi 0, %s70
      %s72 = sphi 0, %s70
      %s73 = sphi 0, %s72
      %s87 = sphi 0, %s73
      %s93 = sphi 0, %s95
      %s96 = sphi 0, %s93
      %s97 = sphi 0, %s96
      %s113 = sphi 0, %s97
    $region4: #{tpu_custom_call.1} parent=1 // loop_header_branch
      %18 = sbr.rel (%p16) target = $region8
    $region5: #{tpu_custom_call.1} parent=1 // loop_body
      %s20 = ssub.s32 %s15, 1
      %s21 = ssub.s32 %s15, 2
      %s22 = sadd.s32 %s15, 1
      %s23 = ssub.s32 %s15, %s22
      %p24 = scmp.eq.s32.totalorder %s23, 0
      %s26 = sadd.s32 %s25, 1
      %s27 = scalar_select %p24, %s25, %s26
      %p30 = pneg %p24
      %p31 = scmp.eq.s32.totalorder %s15, 3
      %p32 = por %p30, %p31
      %p33 = scmp.ne.s32.totalorder %s25, %s28
      %p34 = scmp.eq.s32.totalorder %s15, 0
      %p35 = por %p33, %p34
      %p36 = scmp.ne.s32.totalorder %s25, %s28
      %p37 = scmp.eq.s32.totalorder %s20, 3
      %p38 = por %p36, %p37
      %p39 = scmp.ne.s32.totalorder %s28, %s29
      %p40 = scmp.eq.s32.totalorder %s20, 0
      %p41 = por %p39, %p40
      %p42 = scmp.ne.s32.totalorder %s28, %s29
      %p43 = scmp.eq.s32.totalorder %s21, 3
      %p44 = por %p42, %p43
      %p46 = scmp.ne.s32.totalorder %s29, %s45
      %p47 = scmp.eq.s32.totalorder %s21, 0
      %p48 = por %p46, %p47
      %s50 = sadd.s32 %s49, 1
      %p53 = scmp.eq.s32.totalorder %s15, 3
      %p54 = scmp.ne.s32.totalorder %s49, %s51
      %p55 = scmp.eq.s32.totalorder %s15, 0
      %p56 = por %p54, %p55
      %p57 = scmp.ne.s32.totalorder %s49, %s51
      %p58 = scmp.eq.s32.totalorder %s20, 3
      %p59 = por %p57, %p58
      %p60 = scmp.ne.s32.totalorder %s51, %s52
      %p61 = scmp.eq.s32.totalorder %s20, 0
      %p62 = por %p60, %p61
      %p63 = scmp.ne.s32.totalorder %s51, %s52
      %p64 = scmp.eq.s32.totalorder %s21, 3
      %p65 = por %p63, %p64
      %p67 = scmp.ne.s32.totalorder %s52, %s66
      %p68 = scmp.eq.s32.totalorder %s21, 0
      %p69 = por %p67, %p68
      %s71 = sadd.s32 %s70, 1
      %p74 = scmp.eq.s32.totalorder %s15, 3
      %p75 = scmp.ne.s32.totalorder %s70, %s72
      %p76 = scmp.eq.s32.totalorder %s15, 0
      %p77 = por %p75, %p76
      %p78 = scmp.ne.s32.totalorder %s70, %s72
      %p79 = scmp.eq.s32.totalorder %s20, 3
      %p80 = por %p78, %p79
      %p81 = scmp.ne.s32.totalorder %s72, %s73
      %p82 = scmp.eq.s32.totalorder %s20, 0
      %p83 = por %p81, %p82
      %p84 = scmp.ne.s32.totalorder %s72, %s73
      %p85 = scmp.eq.s32.totalorder %s21, 3
      %p86 = por %p84, %p85
      %p88 = scmp.ne.s32.totalorder %s73, %s87
      %p89 = scmp.eq.s32.totalorder %s21, 0
      %p90 = por %p88, %p89
      %s91 = ssub.s32 %s15, %s22
      %p92 = scmp.eq.s32.totalorder %s91, 0
      %s94 = sadd.s32 %s93, 1
      %s95 = scalar_select %p92, %s93, %s94
      %p98 = pneg %p92
      %p99 = scmp.eq.s32.totalorder %s15, 3
      %p100 = por %p98, %p99
      %p101 = scmp.ne.s32.totalorder %s93, %s96
      %p102 = scmp.eq.s32.totalorder %s15, 0
      %p103 = por %p101, %p102
      %p104 = scmp.ne.s32.totalorder %s93, %s96
      %p105 = scmp.eq.s32.totalorder %s20, 3
      %p106 = por %p104, %p105
      %p107 = scmp.ne.s32.totalorder %s96, %s97
      %p108 = scmp.eq.s32.totalorder %s20, 0
      %p109 = por %p107, %p108
      %p110 = scmp.ne.s32.totalorder %s96, %s97
      %p111 = scmp.eq.s32.totalorder %s21, 3
      %p112 = por %p110, %p111
      %p114 = scmp.ne.s32.totalorder %s97, %s113
      %p115 = scmp.eq.s32.totalorder %s21, 0
      %p116 = por %p114, %p115
      %p117 = scmp.le.s32.totalorder 1, %s15
      %p118 = scmp.lt.s32.totalorder %s15, 5
      %p119 = pnand %p117, %p118
      %p120 = pneg %p119
      // Predicated region
      $region9: #{tpu_custom_call.1} parent=5 // pred_check
        _
      $region10: #{tpu_custom_call.1} parent=5 // pred_check_branch
        %122 = sbr.rel (%p119) target = $region12
      $region11: #{tpu_custom_call.1} parent=5 // pred_region
        %s123 = ssub.s32 %s15, 1
        // Predicated region
        $region13: #{tpu_custom_call.1} parent=11 // pred_check
          %p124 = pneg %p62
        $region14: #{tpu_custom_call.1} parent=11 // pred_check_branch
          %126 = sbr.rel (%p124) target = $region16
        $region15: #{tpu_custom_call.1} parent=11 // pred_region
          _
        $region16: #{tpu_custom_call.1} parent=11 // pred_fallthru
          _
        // Predicated region
        $region17: #{tpu_custom_call.1} parent=11 // pred_check
          %p127 = pneg %p83
        $region18: #{tpu_custom_call.1} parent=11 // pred_check_branch
          %129 = sbr.rel (%p127) target = $region20
        $region19: #{tpu_custom_call.1} parent=11 // pred_region
          _
        $region20: #{tpu_custom_call.1} parent=11 // pred_fallthru
          _
      $region12: #{tpu_custom_call.1} parent=5 // pred_fallthru
        _
      %p130 = scmp.lt.s32.totalorder %s15, 4
      // Predicated region
      $region21: #{tpu_custom_call.1} parent=5 // pred_check
        %p131 = pneg %p130
      $region22: #{tpu_custom_call.1} parent=5 // pred_check_branch
        %133 = sbr.rel (%p131) target = $region24
      $region23: #{tpu_custom_call.1} parent=5 // pred_region
        // Predicated region
        $region25: #{tpu_custom_call.1} parent=23 // pred_check
          %p134 = pneg %p35
        $region26: #{tpu_custom_call.1} parent=23 // pred_check_branch
          %136 = sbr.rel (%p134) target = $region28
        $region27: #{tpu_custom_call.1} parent=23 // pred_region
          %s137 = sand.u32 %s25, 1
          %s138 = scalar_lea.sflag [#allocation3], %s137
          %s139 = sand.u32 %s25, 1
          %s140 = smul.addr %s139, 64
          %s141 = scalar_lea.vmem [#allocation2], %s140
          %s143 = ssub.s32 1024, 1024
          %144 = vsyncadd %s138, %s143
          %s145 = smul.addr %s15, 8
          %s146 = smul.addr %s145, 128
          %s147 = scalar_lea.hbm %s0, %s146
          %s148 = sshll.u32 %s141, 4
          %s149 = int_to_ptr.vmem [resolvable:$true] %s148
          %154 = dma.hbm_to_vmem [thread:$0]  %s147, 1024, %s149, %s138, 128, 128, 8
        $region28: #{tpu_custom_call.1} parent=23 // pred_fallthru
          _
      $region24: #{tpu_custom_call.1} parent=5 // pred_fallthru
        _
      %p155 = scmp.le.s32.totalorder 1, %s15
      %p156 = scmp.lt.s32.totalorder %s15, 5
      %p157 = pnand %p155, %p156
      %p158 = pneg %p157
      // Predicated region
      $region29: #{tpu_custom_call.1} parent=5 // pred_check
        _
      $region30: #{tpu_custom_call.1} parent=5 // pred_check_branch
        %160 = sbr.rel (%p157) target = $region32
      $region31: #{tpu_custom_call.1} parent=5 // pred_region
        %s161 = ssub.s32 %s15, 1
        %s162 = sand.u32 %s28, 1
        %s163 = scalar_lea.sflag [#allocation3], %s162
        %s164 = sand.u32 %s28, 1
        %s165 = smul.addr %s164, 64
        %s166 = scalar_lea.vmem [#allocation2], %s165
        // Predicated region
        $region33: #{tpu_custom_call.1} parent=31 // pred_check
          %p167 = pneg %p41
        $region34: #{tpu_custom_call.1} parent=31 // pred_check_branch
          %169 = sbr.rel (%p167) target = $region36
        $region35: #{tpu_custom_call.1} parent=31 // pred_region
          %170 = dma.done %s163, 1024
        $region36: #{tpu_custom_call.1} parent=31 // pred_fallthru
          _
        %s171 = sand.u32 %s28, 1
        %s172 = scalar_lea.sflag [#allocation3], %s171
        %s173 = sand.u32 %s28, 1
        %s174 = smul.addr %s173, 64
        %s175 = scalar_lea.vmem [#allocation2], %s174
        %p176 = pneg %p41
        %p177 = pneg %p38
        %p178 = pneg %p62
        %p179 = pneg %p59
        %p180 = pneg %p83
        %p181 = pneg %p80
        %p182 = pneg %p109
        %p183 = pneg %p106
        %s184 = sand.u32 %s96, 1
        %s185 = scalar_lea.sflag [#allocation4], %s184
        %s186 = sand.u32 %s96, 1
        %s187 = smul.addr %s186, 96
        %s188 = scalar_lea.vmem [#allocation5], %s187
        %v189 = vld [vmem:[%s166] sm:$0xff]
        %v190 = vld [vmem:[%s166 + $0x8] sm:$0xff]
        %v191 = vld [vmem:[%s166 + $0x10] sm:$0xff]
        %v192 = vld [vmem:[%s166 + $0x18] sm:$0xff]
        %v193 = vld [vmem:[%s166 + $0x20] sm:$0xff]
        %v194 = vld [vmem:[%s166 + $0x28] sm:$0xff]
        %v195 = vld [vmem:[%s166 + $0x30] sm:$0xff]
        %v196 = vld [vmem:[%s166 + $0x38] sm:$0xff]
        %v197 = vld [vmem:[%s1] sm:$0xff]
        %v198 = vld [vmem:[%s1 + $0x8] sm:$0xff]
        %v199 = vld [vmem:[%s1 + $0x10] sm:$0xff]
        %v200 = vld [vmem:[%s1 + $0x18] sm:$0xff]
        %v201 = vld [vmem:[%s2] sm:$0xff]
        %v202 = vld [vmem:[%s2 + $0x8] sm:$0xff]
        %v203 = vld [vmem:[%s2 + $0x10] sm:$0xff]
        %v204 = vld [vmem:[%s2 + $0x18] sm:$0xff]
        %vm205 = vcmask 523264
        %v207 = vsel %vm205, %v197, 0
        %v210 = vsel %vm205, %v198, 0
        %v213 = vsel %vm205, %v199, 0
        %v216 = vsel %vm205, %v200, 0
        %218 = vmatprep.subr.mxu0 0.0
        %219 = vmatpush1.msra.mxu0 %v189
        %220 = vmatprep.subr.mxu0 0.0
        %221 = vmatpush1.msra.mxu0 %v190
        %222 = vmatprep.subr.mxu0 0.0
        %223 = vmatpush1.msra.mxu0 %v191
        %224 = vmatprep.subr.mxu0 0.0
        %225 = vmatpush1.msra.mxu0 %v192
        %226 = vmatprep.subr.mxu0 0.0
        %227 = vmatpush1.msra.mxu0 %v193
        %228 = vmatprep.subr.mxu0 0.0
        %229 = vmatpush1.msra.mxu0 %v194
        %230 = vmatprep.subr.mxu0 0.0
        %231 = vmatpush1.msra.mxu0 %v195
        %232 = vmatprep.subr.mxu0 0.0
        %233 = vmatpush1.msra.mxu0 %v196
        %234 = vmatprep.subr.mxu0 0.0
        %235 = vmatpush1.msra.mxu0 0.0
        %236 = vmatprep.subr.mxu0 0.0
        %237 = vmatpush1.msra.mxu0 0.0
        %238 = vmatprep.subr.mxu0 0.0
        %239 = vmatpush1.msra.mxu0 0.0
        %240 = vmatprep.subr.mxu0 0.0
        %241 = vmatpush1.msra.mxu0 0.0
        %242 = vmatprep.subr.mxu0 0.0
        %243 = vmatpush1.msra.mxu0 0.0
        %244 = vmatprep.subr.mxu0 0.0
        %245 = vmatpush1.msra.mxu0 0.0
        %246 = vmatprep.subr.mxu0 0.0
        %247 = vmatpush1.msra.mxu0 0.0
        %248 = vmatprep.subr.mxu0 0.0
        %249 = vmatpush1.msra.mxu0 0.0
        %250 = vmatprep.subr.mxu0 0.0
        %251 = vmatpush1.msra.mxu0 0.0
        %252 = vmatprep.subr.mxu0 0.0
        %253 = vmatpush1.msra.mxu0 0.0
        %254 = vmatprep.subr.mxu0 0.0
        %255 = vmatpush1.msra.mxu0 0.0
        %256 = vmatprep.subr.mxu0 0.0
        %257 = vmatpush1.msra.mxu0 0.0
        %258 = vmatprep.subr.mxu0 0.0
        %259 = vmatpush1.msra.mxu0 0.0
        %260 = vmatprep.subr.mxu0 0.0
        %261 = vmatpush1.msra.mxu0 0.0
        %262 = vmatprep.subr.mxu0 0.0
        %263 = vmatpush1.msra.mxu0 0.0
        %264 = vmatprep.subr.mxu0 0.0
        %265 = vmatpush1.msra.mxu0 0.0
        %266 = vmatprep.subr.mxu0 0.0
        %267 = vmatpush1.msra.mxu0 0.0
        %268 = vmatprep.subr.mxu0 0.0
        %269 = vmatpush1.msra.mxu0 0.0
        %270 = vmatprep.subr.mxu0 0.0
        %271 = vmatpush1.msra.mxu0 0.0
        %272 = vmatprep.subr.mxu0 0.0
        %273 = vmatpush1.msra.mxu0 0.0
        %274 = vmatprep.subr.mxu0 0.0
        %275 = vmatpush1.msra.mxu0 0.0
        %276 = vmatprep.subr.mxu0 0.0
        %277 = vmatpush1.msra.mxu0 0.0
        %278 = vmatprep.subr.mxu0 0.0
        %279 = vmatpush1.msra.mxu0 0.0
        %280 = vmatprep.subr.mxu0 0.0
        %281 = vmatpush1.msra.mxu0 0.0
        %282 = vmatprep.mubr.f32.mxu0 0.0
        %283 = vmatmul.mubr.f32.gmra.mrb[0].mxu0 %v207
        %v284 = vpop.f32.mrb[0].mxu0
        %v285 = vadd.f32 0.0, %v284
        %v286 = vpop.f32.mrb[0].mxu0
        %287 = vmatprep.mubr.f32.mxu0 0.0
        %288 = vmatmul.mubr.f32.gmra.mrb[0].mxu0 %v210
        %v289 = vpop.f32.mrb[0].mxu0
        %v290 = vadd.f32 0.0, %v289
        %v291 = vpop.f32.mrb[0].mxu0
        %292 = vmatprep.mubr.f32.mxu0 0.0
        %293 = vmatmul.mubr.f32.gmra.mrb[0].mxu0 %v213
        %v294 = vpop.f32.mrb[0].mxu0
        %v295 = vadd.f32 0.0, %v294
        %v296 = vpop.f32.mrb[0].mxu0
        %297 = vmatprep.mubr.f32.mxu0 0.0
        %298 = vmatmul.mubr.f32.gmra.mrb[0].mxu0 %v216
        %v299 = vpop.f32.mrb[0].mxu0
        %v300 = vadd.f32 0.0, %v299
        %v301 = vpop.f32.mrb[0].mxu0
        %302 = vdwg.mxu0
        %303 = vadd.xlane.f32.xlu0 %v285
        %v304 = vpop.xlane.xlu0 %303
        %305 = vadd.xlane.f32.xlu0 %v290
        %v306 = vpop.xlane.xlu0 %305
        %307 = vadd.xlane.f32.xlu0 %v295
        %v308 = vpop.xlane.xlu0 %307
        %309 = vadd.xlane.f32.xlu0 %v300
        %v310 = vpop.xlane.xlu0 %309
        %v311 = vmul.f32 %v285, %v285
        %v312 = vmul.f32 %v290, %v290
        %v313 = vmul.f32 %v295, %v295
        %v314 = vmul.f32 %v300, %v300
        %315 = vadd.xlane.f32.xlu0 %v311
        %v316 = vpop.xlane.xlu0 %315
        %317 = vadd.xlane.f32.xlu0 %v312
        %v318 = vpop.xlane.xlu0 %317
        %319 = vadd.xlane.f32.xlu0 %v313
        %v320 = vpop.xlane.xlu0 %319
        %321 = vadd.xlane.f32.xlu0 %v314
        %v322 = vpop.xlane.xlu0 %321
        %v323 = vmul.f32 %v304, 0.0078125
        %v324 = vmul.f32 %v306, 0.0078125
        %v325 = vmul.f32 %v308, 0.0078125
        %v326 = vmul.f32 %v310, 0.0078125
        %v327 = vmul.f32 %v316, 0.0078125
        %v328 = vmul.f32 %v318, 0.0078125
        %v329 = vmul.f32 %v320, 0.0078125
        %v330 = vmul.f32 %v322, 0.0078125
        %v331 = vmul.f32 %v323, %v323
        %v332 = vmul.f32 %v324, %v324
        %v333 = vmul.f32 %v325, %v325
        %v334 = vmul.f32 %v326, %v326
        %v335 = vsub.f32 %v327, %v331
        %v336 = vsub.f32 %v328, %v332
        %v337 = vsub.f32 %v329, %v333
        %v338 = vsub.f32 %v330, %v334
        %v339 = vmax.f32 %v335, 0.0
        %v340 = vmax.f32 %v336, 0.0
        %v341 = vmax.f32 %v337, 0.0
        %v342 = vmax.f32 %v338, 0.0
        %v343 = vadd.f32 %v339, 1e-05
        %v344 = vadd.f32 %v340, 1e-05
        %v345 = vadd.f32 %v341, 1e-05
        %v346 = vadd.f32 %v342, 1e-05
        %v347 = vrsqrt.pop %v343
        %v348 = vrsqrt.pop %v344
        %v349 = vrsqrt.pop %v345
        %v350 = vrsqrt.pop %v346
        %v351 = vmul.f32 %v201, %v347
        %v352 = vmul.f32 %v202, %v348
        %v353 = vmul.f32 %v203, %v349
        %v354 = vmul.f32 %v204, %v350
        %v355 = vsub.f32 %v285, %v323
        %v356 = vsub.f32 %v290, %v324
        %v357 = vsub.f32 %v295, %v325
        %v358 = vsub.f32 %v300, %v326
        %360 = vset.pattern.permute.xlu0 0
        %361 = vperm.xlu0 %360, %v351
        %v362 = vpop.permute.xlu0 %361
        %365 = vset.pattern.permute.xlu0 0
        %366 = vperm.xlu0 %365, %v352
        %v367 = vpop.permute.xlu0 %366
        %370 = vset.pattern.permute.xlu0 0
        %371 = vperm.xlu0 %370, %v353
        %v372 = vpop.permute.xlu0 %371
        %375 = vset.pattern.permute.xlu0 0
        %376 = vperm.xlu0 %375, %v354
        %v377 = vpop.permute.xlu0 %376
        %v379 = vmul.f32 %v355, %v362
        %v380 = vmul.f32 %v356, %v367
        %v381 = vmul.f32 %v357, %v372
        %v382 = vmul.f32 %v358, %v377
        %384 = vset.pattern.permute.xlu0 1
        %385 = vperm.xlu0 %384, %v201
        %v386 = vpop.permute.xlu0 %385
        %389 = vset.pattern.permute.xlu0 1
        %390 = vperm.xlu0 %389, %v202
        %v391 = vpop.permute.xlu0 %390
        %394 = vset.pattern.permute.xlu0 1
        %395 = vperm.xlu0 %394, %v203
        %v396 = vpop.permute.xlu0 %395
        %399 = vset.pattern.permute.xlu0 1
        %400 = vperm.xlu0 %399, %v204
        %v401 = vpop.permute.xlu0 %400
        %v403 = vadd.f32 %v379, %v386
        %v404 = vadd.f32 %v380, %v391
        %v405 = vadd.f32 %v381, %v396
        %v406 = vadd.f32 %v382, %v401
        %407 = vst [vmem:[%s188] sm:$0xff] %v189
        %408 = vst [vmem:[%s188 + $0x8] sm:$0xff] %v190
        %409 = vst [vmem:[%s188 + $0x10] sm:$0xff] %v191
        %410 = vst [vmem:[%s188 + $0x18] sm:$0xff] %v192
        %s411 = scalar_lea.vmem %s188, 32 [#allocation5]
        %412 = vst [vmem:[%s411] sm:$0xff] %v193
        %413 = vst [vmem:[%s411 + $0x8] sm:$0xff] %v194
        %414 = vst [vmem:[%s411 + $0x10] sm:$0xff] %v195
        %415 = vst [vmem:[%s411 + $0x18] sm:$0xff] %v196
        %s416 = scalar_lea.vmem %s188, 64 [#allocation5]
        %417 = vst [vmem:[%s416] sm:$0xff] %v403
        %418 = vst [vmem:[%s416 + $0x8] sm:$0xff] %v404
        %419 = vst [vmem:[%s416 + $0x10] sm:$0xff] %v405
        %420 = vst [vmem:[%s416 + $0x18] sm:$0xff] %v406
        %s421 = sand.u32 %s96, 1
        %s422 = scalar_lea.sflag [#allocation4], %s421
        %s423 = sand.u32 %s96, 1
        %s424 = smul.addr %s423, 96
        %s425 = scalar_lea.vmem [#allocation5], %s424
        // Predicated region
        $region37: #{tpu_custom_call.1} parent=31 // pred_check
          %p426 = pneg %p106
        $region38: #{tpu_custom_call.1} parent=31 // pred_check_branch
          %428 = sbr.rel (%p426) target = $region40
        $region39: #{tpu_custom_call.1} parent=31 // pred_region
          %s430 = ssub.s32 1536, 1536
          %431 = vsyncadd %s422, %s430
          %s432 = smul.addr %s20, 12
          %s433 = smul.addr %s432, 128
          %s434 = scalar_lea.hbm %s3, %s433
          %s435 = sshll.u32 %s425, 4
          %s436 = int_to_ptr.vmem [resolvable:$true] %s435
          %441 = dma.vmem_to_hbm [thread:$0]  %s436, 1536, %s434, %s422, 128, 128, 8
        $region40: #{tpu_custom_call.1} parent=31 // pred_fallthru
          _
      $region32: #{tpu_custom_call.1} parent=5 // pred_fallthru
        _
      %p442 = scmp.le.s32.totalorder 2, %s15
      // Predicated region
      $region41: #{tpu_custom_call.1} parent=5 // pred_check
        %p443 = pneg %p442
      $region42: #{tpu_custom_call.1} parent=5 // pred_check_branch
        %445 = sbr.rel (%p443) target = $region44
      $region43: #{tpu_custom_call.1} parent=5 // pred_region
        %s446 = ssub.s32 %s15, 2
        // Predicated region
        $region45: #{tpu_custom_call.1} parent=43 // pred_check
          %p447 = pneg %p112
        $region46: #{tpu_custom_call.1} parent=43 // pred_check_branch
          %449 = sbr.rel (%p447) target = $region48
        $region47: #{tpu_custom_call.1} parent=43 // pred_region
          %s450 = sand.u32 %s97, 1
          %s451 = scalar_lea.sflag [#allocation4], %s450
          %s452 = sand.u32 %s97, 1
          %s453 = smul.addr %s452, 96
          %s454 = scalar_lea.vmem [#allocation5], %s453
          %455 = dma.done %s451, 1536
        $region48: #{tpu_custom_call.1} parent=43 // pred_fallthru
          _
      $region44: #{tpu_custom_call.1} parent=5 // pred_fallthru
        _
    $region6: #{tpu_custom_call.1} parent=1 // loop_footer
      %s19 = sadd.s32 1, %s15
    $region7: #{tpu_custom_call.1} parent=1 // loop_footer_branch
      %14 = sbr.rel target = $region3
    $region8: #{tpu_custom_call.1} parent=1 // loop_exit
      _
    %456 = vsyncpa [#allocation3], 1
    %s457 = scalar_lea.sflag [#allocation3], 1
    %458 = vsyncpa %s457, 1
    %459 = vsyncpa [#allocation4], 1
    %s460 = scalar_lea.sflag [#allocation4], 1
    %461 = vsyncpa %s460, 1

</llo_original>
